<compile_context>
chip_gen: v7x
topology: tpu7x:2x2x1
jax: 0.10.0
libtpu: 0.0.40
codegen_flags: <defaults>
</compile_context>

<pallas_src>
import functools

import jax
import jax.numpy as jnp
import numpy as np
from jax.experimental import pallas as pl
from jax.experimental.pallas import tpu as pltpu

_BLUR_TAPS = np.array([0.0884, 0.3536, 0.5303, 0.3536, 0.0884], dtype=np.float32)

# Budget (bytes, in compute dtype) for the dense fused-step operator(s) K.
_DEFAULT_FUSED_OPERATOR_BYTES = 4 << 20
_MAX_BLOCK_ROWS = 2048


def _ceil_div(a: int, b: int) -> int:
    return -(-a // b)


def _round_down(v: int, m: int) -> int:
    return (v // m) * m


def _round_up(v: int, m: int) -> int:
    return _ceil_div(v, m) * m


# ----------------------------------------------------------------------------
# Operator construction (plain numpy glue; the hot path is the Pallas matmuls).
# ----------------------------------------------------------------------------
def _band_blur_matrix(n: int) -> np.ndarray:
    """M (n, n) with (x @ M)[i] = sum_k taps[k] * x[clip(i + k - 2, 0, n - 1)]."""
    m = np.zeros((n, n), dtype=np.float64)
    taps = _BLUR_TAPS.astype(np.float64)
    cols = np.arange(n)
    for k in range(5):
        rows = np.clip(cols + k - 2, 0, n - 1)
        np.add.at(m, (rows, cols), taps[k])
    return m


def _pool_matrix(n: int) -> np.ndarray:
    """M (n, n//2) with (x @ M)[j] = 0.5 * (x[2j] + x[2j+1])  (floor division)."""
    n2 = n // 2
    m = np.zeros((n, n2), dtype=np.float64)
    j = np.arange(n2)
    m[2 * j, j] = 0.5
    m[2 * j + 1, j] = 0.5
    return m


@functools.lru_cache(maxsize=None)
def _composed_operator(h: int, w: int, steps: int) -> np.ndarray:
    """Dense operator K (h*w, h_out*w_out) for `steps` consecutive blur+pool steps."""
    total = None
    hh, ww = h, w
    for _ in range(steps):
        k_h = _band_blur_matrix(hh) @ _pool_matrix(hh)   # (hh, hh//2)  blur+pool along H
        k_w = _band_blur_matrix(ww) @ _pool_matrix(ww)   # (ww, ww//2)  blur+pool along W
        k = np.kron(k_h, k_w)                            # (hh*ww, (hh//2)*(ww//2))
        total = k if total is None else total @ k
        hh, ww = hh // 2, ww // 2
    return total.astype(np.float32)


# ----------------------------------------------------------------------------
# Per-generation configuration.
# ----------------------------------------------------------------------------
@functools.lru_cache(maxsize=None)
def _chip_config():
    """(vmem_limit_bytes, num_parallel_cores, lane_align) for the current TPU."""
    kind = ""
    try:
        kind = jax.devices()[0].device_kind.lower()
    except Exception:
        pass
    vmem_capacity = None
    try:
        vmem_capacity = int(pltpu.get_tpu_info().vmem_capacity_bytes)
    except Exception:
        pass
    if vmem_capacity is None:
        # Conservative (v7x-sized) default unless we positively know a 128 MiB chip.
        vmem_capacity = (128 << 20) if (kind and "v7" not in kind) else (64 << 20)
    # Chips whose "parallel" grid axes are sharded across 2 TensorCores (megacore):
    # v4 / v5p / v7x.  v5e / v6e have a single TC, where splitting is pure overhead.
    megacore = ("v7" in kind or "v4" in kind
                or ("v5" in kind and "lite" not in kind and "v5e" not in kind))
    num_cores = 2 if megacore else 1
    # Scoped VMEM handed to Mosaic: half the physical capacity, capped at 64 MiB
    # (-> 64 MiB on 128 MiB chips, 32 MiB on v7x's 64 MiB).
    vmem_limit = min(vmem_capacity // 2, 64 << 20)
    # v6e/v7x MXUs are 2x256^2: pad the GEMM N dim to 256 there; 128 matches v5e.
    lane_align = 256 if ("v6" in kind or "v7" in kind) else 128
    return vmem_limit, num_cores, lane_align


def _probe_copy_kernel(x_ref, o_ref):
    o_ref[...] = x_ref[...]


@functools.lru_cache(maxsize=None)
def _single_buffer_mode():
    """pl.Buffered(1) if single-buffering grid-invariant operands lowers cleanly, else None."""
    try:
        mode = pl.Buffered(1)
        f = pl.pallas_call(
            _probe_copy_kernel,
            out_shape=jax.ShapeDtypeStruct((16, 128), jnp.float32),
            grid=(2,),
            in_specs=[pl.BlockSpec((8, 128), lambda i: (0, 0), pipeline_mode=mode)],
            out_specs=pl.BlockSpec((8, 128), lambda i: (i, 0)),
        )
        jax.block_until_ready(f(jnp.zeros((8, 128), jnp.float32)))
        return mode
    except Exception:
        return None


def _const_spec(block_shape, index_map):
    """BlockSpec for a grid-invariant operand (operator matrices): fetched once and
    single-buffered when supported, so its second pipeline buffer does not eat into
    the batch-row VMEM budget."""
    mode = _single_buffer_mode()
    if mode is not None:
        return pl.BlockSpec(block_shape, index_map, pipeline_mode=mode)
    return pl.BlockSpec(block_shape, index_map)


def _pick_block_rows(b, per_row_bytes, budget_bytes, num_cores, align):
    """Rows per grid block: sized to the VMEM budget, multiple of `align` (or == b),
    split into >= num_cores balanced blocks only on megacore chips."""
    if b <= align:
        return b
    cap = _round_down(budget_bytes // max(per_row_bytes, 1), align)
    cap = max(align, min(cap, _MAX_BLOCK_ROWS))
    if num_cores >= 2 and b >= 2 * align:
        cap = min(cap, max(align, _round_down(_ceil_div(b, num_cores), align)))
    if cap >= b:
        return b                           # single block: best on 1-TC chips
    nblk = _ceil_div(b, cap)               # balance blocks so the tail isn't tiny
    return max(align, min(_round_up(_ceil_div(b, nblk), align), cap, b))


# ----------------------------------------------------------------------------
# Pallas kernels.
# ----------------------------------------------------------------------------
def _fused_levels_kernel(x_ref, *refs):
    # x_ref:  (TB, H*W)                  one batch block, spatial dims flattened
    # refs:   k_ref_0..k_ref_{L-1}       fused blur+pool operators (compute dtype, lane-padded)
    #         o_ref_0..o_ref_{L-1}       (TB, N_pad_l) per requested level
    nlev = len(refs) // 2
    k_refs, o_refs = refs[:nlev], refs[nlev:]
    x = x_ref[...].astype(k_refs[0].dtype)        # cast once on the VPU (free under MXU/DMA)
    for k_ref, o_ref in zip(k_refs, o_refs):
        y = jnp.dot(x, k_ref[...], preferred_element_type=jnp.float32)
        o_ref[...] = y.astype(o_ref.dtype)


def _two_matmul_kernel(x_ref, ah_ref, aw_ref, o_ref, y_scratch):
    # x_ref:     (TB, H, W)
    # ah_ref:    (H2, H)  pool@blur along H (compute dtype), grid-invariant
    # aw_ref:    (W, W2)  blur@pool along W (compute dtype), grid-invariant
    # o_ref:     (TB, H2, W2)
    # y_scratch: (TB, H, W2) VMEM  W-blurred intermediate (bounds vreg pressure)
    tb, h, w = x_ref.shape
    w2 = aw_ref.shape[1]
    cdt = aw_ref.dtype
    # W axis: one slab GEMM over every row of the whole batch block.
    x2d = x_ref[...].reshape(tb * h, w).astype(cdt)
    y = jnp.dot(x2d, aw_ref[...], preferred_element_type=jnp.float32)      # (TB*H, W2)
    y_scratch[...] = y.reshape(tb, h, w2).astype(y_scratch.dtype)
    # H axis: per-image GEMM from VMEM scratch via fori_loop (no static Python unroll,
    # so TB is sized by the VMEM budget only).
    a_h = ah_ref[...]

    def body(bi, carry):
        o_ref[bi] = jnp.dot(a_h, y_scratch[bi],
                            preferred_element_type=jnp.float32).astype(o_ref.dtype)
        return carry

    jax.lax.fori_loop(0, tb, body, 0)


# ----------------------------------------------------------------------------
# pallas_call wrappers.
# ----------------------------------------------------------------------------
def _fused_levels_call(x_flat, k_nps, compute_dtype, out_dtype):
    """Compute one or more pyramid levels from the same source, one GEMM per level,
    in a single pallas_call (x is read from HBM once per grid block)."""
    b, hw = x_flat.shape
    vmem_limit, num_cores, lane_align = _chip_config()
    c_isz = jnp.dtype(compute_dtype).itemsize
    x_isz = jnp.dtype(x_flat.dtype).itemsize
    o_isz = jnp.dtype(out_dtype).itemsize

    ks, n_outs, n_pads = [], [], []
    for k_np in k_nps:
        n_out = k_np.shape[1]
        n_pad = 128 if n_out <= 128 else _round_up(n_out, lane_align)   # lane-dense stores
        if n_pad != n_out:
            k_np = np.pad(k_np, ((0, 0), (0, n_pad - n_out)))
        ks.append(jnp.asarray(k_np, dtype=compute_dtype))
        n_outs.append(n_out)
        n_pads.append(n_pad)

    op_bytes = sum(hw * p * c_isz for p in n_pads)             # single-buffered constants
    per_row = (2 * hw * x_isz                                   # double-buffered input block
               + hw * c_isz                                     # in-kernel cast copy
               + sum(2 * p * o_isz + p * 4 for p in n_pads))    # double-buffered outs + f32 acc
    budget = max(vmem_limit - op_bytes - (4 << 20), per_row * 8)
    tb = _pick_block_rows(b, per_row, budget, num_cores, align=8)
    num_blocks = pl.cdiv(b, tb)

    cost = pl.CostEstimate(
        flops=int(sum(2 * b * hw * p for p in n_pads)),
        transcendentals=0,
        bytes_accessed=int(b * hw * x_isz + sum(b * p * o_isz for p in n_pads) + op_bytes))

    in_specs = [pl.BlockSpec((tb, hw), lambda i: (i, 0))]
    in_specs += [_const_spec((hw, p), lambda i: (0, 0)) for p in n_pads]
    out_specs = tuple(pl.BlockSpec((tb, p), lambda i: (i, 0)) for p in n_pads)
    out_shape = tuple(jax.ShapeDtypeStruct((b, p), out_dtype) for p in n_pads)

    outs = pl.pallas_call(
        _fused_levels_kernel,
        out_shape=out_shape,
        grid=(num_blocks,),
        in_specs=in_specs,
        out_specs=out_specs,
        compiler_params=pltpu.CompilerParams(
            dimension_semantics=("parallel",),
            vmem_limit_bytes=int(vmem_limit)),
        cost_estimate=cost,
    )(x_flat, *ks)
    # Pad columns are only sliced off for levels that are actually materialized.
    return [o if p == n else o[:, :n] for o, n, p in zip(outs, n_outs, n_pads)]


def _two_matmul_call(x3, compute_dtype, out_dtype):
    b, h, w = x3.shape
    h2, w2 = h // 2, w // 2
    vmem_limit, num_cores, _ = _chip_config()
    c_isz = jnp.dtype(compute_dtype).itemsize
    x_isz = jnp.dtype(x3.dtype).itemsize
    o_isz = jnp.dtype(out_dtype).itemsize

    a_h = (_band_blur_matrix(h) @ _pool_matrix(h)).T.astype(np.float32)   # (h2, h)
    a_w = (_band_blur_matrix(w) @ _pool_matrix(w)).astype(np.float32)     # (w, w2)

    op_bytes = (h2 * h + w * w2) * c_isz                                  # single-buffered
    per_img = (2 * h * w * x_isz + 2 * h2 * w2 * o_isz        # double-buffered in/out blocks
               + h * w * c_isz + h * w2 * 4                   # in-kernel cast + f32 W-GEMM out
               + h * w2 * c_isz + h2 * w2 * 4)                # VMEM scratch + H-GEMM temp
    budget = max(vmem_limit - op_bytes - (4 << 20), per_img)
    tb = _pick_block_rows(b, per_img, budget, num_cores, align=1)
    num_blocks = pl.cdiv(b, tb)

    cost = pl.CostEstimate(
        flops=int(2 * b * h * w * w2 + 2 * b * h2 * h * w2),
        transcendentals=0,
        bytes_accessed=int(b * h * w * x_isz + b * h2 * w2 * o_isz + op_bytes))

    # TODO(synk): for very large levels (W >= ~800 on v5e) a banded / shifted-add
    # (pltpu.roll + VPU) formulation avoids the dense-operator O(W) FLOP blowup.
    return pl.pallas_call(
        _two_matmul_kernel,
        out_shape=jax.ShapeDtypeStruct((b, h2, w2), out_dtype),
        grid=(num_blocks,),
        in_specs=[pl.BlockSpec((tb, h, w), lambda i: (i, 0, 0)),
                  _const_spec((h2, h), lambda i: (0, 0)),
                  _const_spec((w, w2), lambda i: (0, 0))],
        out_specs=pl.BlockSpec((tb, h2, w2), lambda i: (i, 0, 0)),
        scratch_shapes=[pltpu.VMEM((tb, h, w2), compute_dtype)],
        compiler_params=pltpu.CompilerParams(
            dimension_semantics=("parallel",),
            vmem_limit_bytes=int(vmem_limit)),
        cost_estimate=cost,
    )(x3, jnp.asarray(a_h, dtype=compute_dtype), jnp.asarray(a_w, dtype=compute_dtype))


def _downsample_steps(x5, steps, compute_dtype, max_fused_operator_bytes,
                      out_dtype=jnp.float32):
    """Apply `steps` blur(replicate) + 2x2-avg-pool steps to (N, C, T, H, W)."""
    n, c, t, _, _ = x5.shape
    b = n * c * t
    isz = jnp.dtype(compute_dtype).itemsize
    cur = x5
    remaining = steps
    while remaining > 0:
        hh, ww = cur.shape[3], cur.shape[4]
        h2, w2 = hh // 2, ww // 2
        if h2 == 0 or w2 == 0:
            raise ValueError(f"Cannot downsample spatial dims ({hh}, {ww}) further.")
        if hh * ww * h2 * w2 * isz <= max_fused_operator_bytes:
            # Fuse ALL remaining steps into one GEMM (the composed operator is never
            # larger than a single-step one), removing every intermediate HBM round trip.
            s = remaining
            while s > 1 and ((hh >> s) == 0 or (ww >> s) == 0):
                s -= 1
            k = _composed_operator(hh, ww, s)
            h_out, w_out = hh >> s, ww >> s
            step_out_dtype = out_dtype if s == remaining else compute_dtype
            out = _fused_levels_call(cur.reshape(b, hh * ww), [k],
                                     compute_dtype, step_out_dtype)[0]
            cur = out.reshape(n, c, t, h_out, w_out)
            remaining -= s
        else:
            # Large level: two-matmul path; keep chained intermediates in compute dtype.
            step_out_dtype = out_dtype if remaining == 1 else compute_dtype
            out = _two_matmul_call(cur.reshape(b, hh, ww), compute_dtype, step_out_dtype)
            cur = out.reshape(n, c, t, h2, w2)
            remaining -= 1
    return cur


# ----------------------------------------------------------------------------
# Module.
# ----------------------------------------------------------------------------
class ImagePyramid:
    """Image pyramid based on downsampling by a factor of 2 (Pallas TPU version)."""

    def __init__(self, levels, compute_dtype=jnp.bfloat16,
                 max_fused_operator_bytes=_DEFAULT_FUSED_OPERATOR_BYTES):
        levels = sorted(set(int(l) for l in levels))
        if levels[0] < 0:
            raise ValueError(f"Expected all levels to be non-negative, but got levels={levels!r}")
        self.levels = levels
        self.compute_dtype = compute_dtype
        self.max_fused_operator_bytes = max_fused_operator_bytes

    def __call__(self, x):
        # x: (N, C=1, T, H, W) float, matches the PyTorch NCDHW Conv3d input.
        x = x.astype(jnp.float32)
        n, c, t, h, w = x.shape
        b = n * c * t
        isz = jnp.dtype(self.compute_dtype).itemsize
        results = {}
        if 0 in self.levels:
            results[0] = x
        down_levels = [l for l in self.levels if l > 0]
        if down_levels:
            max_l = down_levels[-1]
            op_bytes = sum(h * w * (h >> l) * (w >> l) * isz for l in down_levels)
            if (h >> max_l) > 0 and (w >> max_l) > 0 and op_bytes <= self.max_fused_operator_bytes:
                # Small images: every requested level straight from x in ONE pallas_call
                # (one pre-composed GEMM operator per level; x read from HBM once).
                ks = [_composed_operator(h, w, l) for l in down_levels]
                outs = _fused_levels_call(x.reshape(b, h * w), ks,
                                          self.compute_dtype, jnp.float32)
                for l, o in zip(down_levels, outs):
                    results[l] = o.reshape(n, c, t, h >> l, w >> l)
            else:
                # Large images: chain level to level; only requested levels are
                # materialized in float32, intermediates stay in the compute dtype.
                cur, cur_level = x, 0
                for l in down_levels:
                    cur = _downsample_steps(cur, l - cur_level, self.compute_dtype,
                                            self.max_fused_operator_bytes,
                                            out_dtype=jnp.float32)
                    cur_level = l
                    results[l] = cur
        return [results[l] for l in self.levels]


# ----------------------------------------------------------------------------
# Pure-JAX reference (for correctness checks only).
# ----------------------------------------------------------------------------
def _ref_step(x: jax.Array) -> jax.Array:
    """One blur (replicate pad) + 2x2 avg-pool step on (B, H, W)."""
    taps = jnp.asarray(_BLUR_TAPS)
    B, H, W = x.shape
    xp = jnp.pad(x, ((0, 0), (0, 0), (2, 2)), mode="edge")
    bx = sum(taps[k] * xp[:, :, k:k + W] for k in range(5))
    bp = jnp.pad(bx, ((0, 0), (2, 2), (0, 0)), mode="edge")
    by = sum(taps[k] * bp[:, k:k + H, :] for k in range(5))
    return 0.25 * (by[:, 0::2, 0::2] + by[:, 1::2, 0::2]
                   + by[:, 0::2, 1::2] + by[:, 1::2, 1::2])


if __name__ == "__main__":
    key = jax.random.PRNGKey(0)
    N, C, T, H, W = 2, 1, 8, 16, 16
    x = jax.random.normal(key, (N, C, T, H, W), dtype=jnp.float32)

    # Default configuration: bf16 MXU compute, multi-level fused-GEMM path.
    model = ImagePyramid(levels=[0, 1, 2])
    pyramid = [jax.block_until_ready(p) for p in model(x)]
    expected_shapes = [(N, C, T, H, W), (N, C, T, H // 2, W // 2), (N, C, T, H // 4, W // 4)]
    assert [tuple(p.shape) for p in pyramid] == expected_shapes, [p.shape for p in pyramid]

    # Pure-JAX reference.
    flat = x.reshape(N * C * T, H, W)
    want1 = _ref_step(flat)
    want2 = _ref_step(want1)

    # f32-compute path: tight check of both downsampled levels (fused multi-level kernel).
    model_f32 = ImagePyramid(levels=[0, 1, 2], compute_dtype=jnp.float32)
    pyr_f32 = [jax.block_until_ready(p) for p in model_f32(x)]
    np.testing.assert_allclose(np.asarray(pyr_f32[1]).reshape(want1.shape), np.asarray(want1),
                               rtol=2e-5, atol=2e-5)
    np.testing.assert_allclose(np.asarray(pyr_f32[2]).reshape(want2.shape), np.asarray(want2),
                               rtol=2e-5, atol=2e-5)

    # bf16-compute path (default): loose check; accumulation stays f32 on the MXU.
    np.testing.assert_allclose(np.asarray(pyramid[1]).reshape(want1.shape), np.asarray(want1),
                               rtol=5e-2, atol=5e-2)
    np.testing.assert_allclose(np.asarray(pyramid[2]).reshape(want2.shape), np.asarray(want2),
                               rtol=5e-2, atol=5e-2)

    # Force the two-matmul (large-level) kernel and chained-level path and check it too.
    model_2mm = ImagePyramid(levels=[1, 2], compute_dtype=jnp.float32,
                             max_fused_operator_bytes=0)
    pyr_2mm = [jax.block_until_ready(p) for p in model_2mm(x)]
    assert [tuple(p.shape) for p in pyr_2mm] == expected_shapes[1:]
    np.testing.assert_allclose(np.asarray(pyr_2mm[0]).reshape(want1.shape), np.asarray(want1),
                               rtol=2e-5, atol=2e-5)
    np.testing.assert_allclose(np.asarray(pyr_2mm[1]).reshape(want2.shape), np.asarray(want2),
                               rtol=2e-5, atol=2e-5)

    print("KERNEL_OK")
</pallas_src>

<mosaic_0001>
module attributes {stable_mosaic.version = 11 : i64} {
  func.func @_probe_copy_kernel(%arg0: i32, %arg1: memref<8x128xf32, #tpu.memory_space<vmem>>, %arg2: memref<8x128xf32, #tpu.memory_space<vmem>>) attributes {dimension_semantics = [#tpu.dimension_semantics<arbitrary>], iteration_bounds = array<i64: 2>, scalar_prefetch = 0 : i64, scratch_operands = 0 : i64, tpu.core_type = #tpu.core_type<tc>, window_params = [{pipeline_mode = #tpu.pipeline_mode<synchronous>, transform_indices = @transform_0, window_bounds = array<i64: 8, 128>}, {transform_indices = @transform_1, window_bounds = array<i64: 8, 128>}]} {
    %c0 = arith.constant 0 : index
    %c0_0 = arith.constant 0 : index
    %0 = vector.load %arg1[%c0, %c0_0] : memref<8x128xf32, #tpu.memory_space<vmem>>, vector<8x128xf32>
    %c0_1 = arith.constant 0 : index
    %c0_2 = arith.constant 0 : index
    %1 = vector.load %arg2[%c0_1, %c0_2] : memref<8x128xf32, #tpu.memory_space<vmem>>, vector<8x128xf32>
    tpu.vector_store %arg2[%c0_1, %c0_2], %0 {strides = array<i32>} : memref<8x128xf32, #tpu.memory_space<vmem>>, vector<8x128xf32>,
    return
  }
  func.func @transform_0(%arg0: i32) -> (i32, i32) {
    %c0_i32 = arith.constant 0 : i32
    %c0_i32_0 = arith.constant 0 : i32
    %c0_i32_1 = arith.constant 0 : i32
    return %c0_i32, %c0_i32_0 : i32, i32
  }
  func.func @transform_1(%arg0: i32) -> (i32, i32) {
    %c0_i32 = arith.constant 0 : i32
    %c0_i32_0 = arith.constant 0 : i32
    return %arg0, %c0_i32 : i32, i32
  }
}

module attributes {stable_mosaic.version = 11 : i64} {
  func.func @_fused_levels_kernel(%arg0: i32, %arg1: memref<16x256xf32, #tpu.memory_space<vmem>>, %arg2: memref<256x128xbf16, #tpu.memory_space<vmem>>, %arg3: memref<256x128xbf16, #tpu.memory_space<vmem>>, %arg4: memref<16x128xf32, #tpu.memory_space<vmem>>, %arg5: memref<16x128xf32, #tpu.memory_space<vmem>>) attributes {dimension_semantics = [#tpu.dimension_semantics<parallel>], iteration_bounds = array<i64: 1>, scalar_prefetch = 0 : i64, scratch_operands = 0 : i64, tpu.core_type = #tpu.core_type<tc>, window_params = [{transform_indices = @transform_0, window_bounds = array<i64: 16, 256>}, {pipeline_mode = #tpu.pipeline_mode<synchronous>, transform_indices = @transform_1, window_bounds = array<i64: 256, 128>}, {pipeline_mode = #tpu.pipeline_mode<synchronous>, transform_indices = @transform_2, window_bounds = array<i64: 256, 128>}, {transform_indices = @transform_3, window_bounds = array<i64: 16, 128>}, {transform_indices = @transform_4, window_bounds = array<i64: 16, 128>}]} {
    %c0 = arith.constant 0 : index
    %c0_0 = arith.constant 0 : index
    %0 = vector.load %arg1[%c0, %c0_0] : memref<16x256xf32, #tpu.memory_space<vmem>>, vector<16x256xf32>
    %1 = arith.truncf %0 : vector<16x256xf32> to vector<16x256xbf16>
    %c0_1 = arith.constant 0 : index
    %c0_2 = arith.constant 0 : index
    %2 = vector.load %arg2[%c0_1, %c0_2] : memref<256x128xbf16, #tpu.memory_space<vmem>>, vector<256x128xbf16>
    %cst = arith.constant dense<0.000000e+00> : vector<16x128xf32>
    %3 = tpu.matmul %1, %2, %cst {dimension_numbers = #tpu.dot_dimension_numbers<[1], [0], [0], [1], [0, 0, 1, 1], [], []>} : vector<16x256xbf16>, vector<256x128xbf16>, vector<16x128xf32> -> vector<16x128xf32>
    %c0_3 = arith.constant 0 : index
    %c0_4 = arith.constant 0 : index
    %4 = vector.load %arg4[%c0_3, %c0_4] : memref<16x128xf32, #tpu.memory_space<vmem>>, vector<16x128xf32>
    tpu.vector_store %arg4[%c0_3, %c0_4], %3 {strides = array<i32>} : memref<16x128xf32, #tpu.memory_space<vmem>>, vector<16x128xf32>,
    %c0_5 = arith.constant 0 : index
    %c0_6 = arith.constant 0 : index
    %5 = vector.load %arg3[%c0_5, %c0_6] : memref<256x128xbf16, #tpu.memory_space<vmem>>, vector<256x128xbf16>
    %cst_7 = arith.constant dense<0.000000e+00> : vector<16x128xf32>
    %6 = tpu.matmul %1, %5, %cst_7 {dimension_numbers = #tpu.dot_dimension_numbers<[1], [0], [0], [1], [0, 0, 1, 1], [], []>} : vector<16x256xbf16>, vector<256x128xbf16>, vector<16x128xf32> -> vector<16x128xf32>
    %c0_8 = arith.constant 0 : index
    %c0_9 = arith.constant 0 : index
    %7 = vector.load %arg5[%c0_8, %c0_9] : memref<16x128xf32, #tpu.memory_space<vmem>>, vector<16x128xf32>
    tpu.vector_store %arg5[%c0_8, %c0_9], %6 {strides = array<i32>} : memref<16x128xf32, #tpu.memory_space<vmem>>, vector<16x128xf32>,
    return
  }
  func.func @transform_0(%arg0: i32) -> (i32, i32) {
    %c0_i32 = arith.constant 0 : i32
    %c0_i32_0 = arith.constant 0 : i32
    return %arg0, %c0_i32 : i32, i32
  }
  func.func @transform_1(%arg0: i32) -> (i32, i32) {
    %c0_i32 = arith.constant 0 : i32
    %c0_i32_0 = arith.constant 0 : i32
    %c0_i32_1 = arith.constant 0 : i32
    return %c0_i32, %c0_i32_0 : i32, i32
  }
  func.func @transform_2(%arg0: i32) -> (i32, i32) {
    %c0_i32 = arith.constant 0 : i32
    %c0_i32_0 = arith.constant 0 : i32
    %c0_i32_1 = arith.constant 0 : i32
    return %c0_i32, %c0_i32_0 : i32, i32
  }
  func.func @transform_3(%arg0: i32) -> (i32, i32) {
    %c0_i32 = arith.constant 0 : i32
    %c0_i32_0 = arith.constant 0 : i32
    return %arg0, %c0_i32 : i32, i32
  }
  func.func @transform_4(%arg0: i32) -> (i32, i32) {
    %c0_i32 = arith.constant 0 : i32
    %c0_i32_0 = arith.constant 0 : i32
    return %arg0, %c0_i32 : i32, i32
  }
}

</mosaic_0001>

<llo_original>
// kernel: tpu_custom_call.1
$region0: #{tpu_custom_call.1}
  #allocation0 [shape = 'u32[]', space=smem, size = 0x4, offset = 0x4, fixed_abs, tag = 'smem constant byte address 0x4 - core index']
  #allocation1 [shape = 'u32[144,128]{1,0:T(1,128)}', space=vmem, size = 0x12000, scoped, tag = 'internal scratch']
  %s0 = inlined_call_operand.hbm [shape: f32[8,128], index: 0, kind: input, shape index: {}]
  %s1 = inlined_call_operand.hbm [shape: f32[16,128], index: 1, kind: output, shape index: {}]
  %s2 = sld [smem:[#allocation0]]
  $region41: #{tpu_custom_call.1} parent=0
    _
  %s4 = ssub.s32 1, %s2
  %s5 = scalar_select 0, %s4, %s2
  $region1: #{tpu_custom_call.1} parent=0
    #allocation2 [shape = 'u8[4096]{0}', space=vmem, size = 0x1000, scoped, tag = 'input window, operand 0, single buffered']
    #allocation3 [shape = 's32[2]{0}', space=sflag, size = 0x8, scoped, tag = 'scoped memory for tpu_custom_call.1']
    #allocation4 [shape = 's32[2]{0}', space=sflag, size = 0x8, scoped, tag = 'scoped memory for tpu_custom_call.1']
    #allocation5 [shape = 'u8[8192]{0}', space=vmem, size = 0x2000, scoped, tag = 'output window, operand 0']
    %6 = vsyncpa [#allocation3], 0
    %7 = vsyncpa [#allocation4], 0
    %s8 = scalar_lea.sflag [#allocation4], 1
    %9 = vsyncpa %s8, 0
    loop: start=0, step=1, limit=4
    $region2: #{tpu_custom_call.1} parent=1 // loop_pre_header
      _
    $region3: #{tpu_custom_call.1} parent=1 // loop_header
      %s11 = sphi 0, %s15
      %p12 = scmp.ge.s32.totalorder %s11, 4
      %s19 = sphi 0, %s19
      %s21 = sphi 0, %s19
      %s22 = sphi 0, %s21
      %s36 = sphi 0, %s22
      %s42 = sphi 0, %s44
      %s45 = sphi 0, %s42
      %s46 = sphi 0, %s45
      %s62 = sphi 0, %s46
    $region4: #{tpu_custom_call.1} parent=1 // loop_header_branch
      %14 = sbr.rel (%p12) target = $region8
    $region5: #{tpu_custom_call.1} parent=1 // loop_body
      %s16 = ssub.s32 %s11, 1
      %s17 = ssub.s32 %s11, 2
      %s18 = sadd.s32 %s11, 1
      %s20 = sadd.s32 %s19, 1
      %p23 = scmp.eq.s32.totalorder %s11, 1
      %p24 = scmp.ne.s32.totalorder %s19, %s21
      %p25 = scmp.eq.s32.totalorder %s11, 0
      %p26 = por %p24, %p25
      %p27 = scmp.ne.s32.totalorder %s19, %s21
      %p28 = scmp.eq.s32.totalorder %s16, 1
      %p29 = por %p27, %p28
      %p30 = scmp.ne.s32.totalorder %s21, %s22
      %p31 = scmp.eq.s32.totalorder %s16, 0
      %p32 = por %p30, %p31
      %p33 = scmp.ne.s32.totalorder %s21, %s22
      %p34 = scmp.eq.s32.totalorder %s17, 1
      %p35 = por %p33, %p34
      %p37 = scmp.ne.s32.totalorder %s22, %s36
      %p38 = scmp.eq.s32.totalorder %s17, 0
      %p39 = por %p37, %p38
      %s40 = ssub.s32 %s11, %s18
      %p41 = scmp.eq.s32.totalorder %s40, 0
      %s43 = sadd.s32 %s42, 1
      %s44 = scalar_select %p41, %s42, %s43
      %p47 = pneg %p41
      %p48 = scmp.eq.s32.totalorder %s11, 1
      %p49 = por %p47, %p48
      %p50 = scmp.ne.s32.totalorder %s42, %s45
      %p51 = scmp.eq.s32.totalorder %s11, 0
      %p52 = por %p50, %p51
      %p53 = scmp.ne.s32.totalorder %s42, %s45
      %p54 = scmp.eq.s32.totalorder %s16, 1
      %p55 = por %p53, %p54
      %p56 = scmp.ne.s32.totalorder %s45, %s46
      %p57 = scmp.eq.s32.totalorder %s16, 0
      %p58 = por %p56, %p57
      %p59 = scmp.ne.s32.totalorder %s45, %s46
      %p60 = scmp.eq.s32.totalorder %s17, 1
      %p61 = por %p59, %p60
      %p63 = scmp.ne.s32.totalorder %s46, %s62
      %p64 = scmp.eq.s32.totalorder %s17, 0
      %p65 = por %p63, %p64
      %p66 = scmp.le.s32.totalorder 1, %s11
      %p67 = scmp.lt.s32.totalorder %s11, 3
      %p68 = pnand %p66, %p67
      %p69 = pneg %p68
      // Predicated region
      $region9: #{tpu_custom_call.1} parent=5 // pred_check
        _
      $region10: #{tpu_custom_call.1} parent=5 // pred_check_branch
        %71 = sbr.rel (%p68) target = $region12
      $region11: #{tpu_custom_call.1} parent=5 // pred_region
        %s72 = ssub.s32 %s11, 1
        // Predicated region
        $region13: #{tpu_custom_call.1} parent=11 // pred_check
          %p73 = pneg %p32
        $region14: #{tpu_custom_call.1} parent=11 // pred_check_branch
          %75 = sbr.rel (%p73) target = $region16
        $region15: #{tpu_custom_call.1} parent=11 // pred_region
          %s77 = ssub.s32 128, 128
          %78 = vsyncadd [#allocation3], %s77
          %s80 = sshll.u32 [#allocation2], 4
          %s81 = int_to_ptr.vmem [resolvable:$true] %s80
          %83 = dma.hbm_to_vmem [thread:$0]  %s0, 128, %s81, [#allocation3]
        $region16: #{tpu_custom_call.1} parent=11 // pred_fallthru
          _
      $region12: #{tpu_custom_call.1} parent=5 // pred_fallthru
        _
      %p84 = scmp.lt.s32.totalorder %s11, 2
      // Predicated region
      $region17: #{tpu_custom_call.1} parent=5 // pred_check
        %p85 = pneg %p84
      $region18: #{tpu_custom_call.1} parent=5 // pred_check_branch
        %87 = sbr.rel (%p85) target = $region20
      $region19: #{tpu_custom_call.1} parent=5 // pred_region
        _
      $region20: #{tpu_custom_call.1} parent=5 // pred_fallthru
        _
      %p88 = scmp.le.s32.totalorder 1, %s11
      %p89 = scmp.lt.s32.totalorder %s11, 3
      %p90 = pnand %p88, %p89
      %p91 = pneg %p90
      // Predicated region
      $region21: #{tpu_custom_call.1} parent=5 // pred_check
        _
      $region22: #{tpu_custom_call.1} parent=5 // pred_check_branch
        %93 = sbr.rel (%p90) target = $region24
      $region23: #{tpu_custom_call.1} parent=5 // pred_region
        %s94 = ssub.s32 %s11, 1
        // Predicated region
        $region25: #{tpu_custom_call.1} parent=23 // pred_check
          %p95 = pneg %p32
        $region26: #{tpu_custom_call.1} parent=23 // pred_check_branch
          %97 = sbr.rel (%p95) target = $region28
        $region27: #{tpu_custom_call.1} parent=23 // pred_region
          %98 = dma.done [#allocation3], 128
        $region28: #{tpu_custom_call.1} parent=23 // pred_fallthru
          _
        %p99 = pneg %p32
        %p100 = pneg %p29
        %p101 = pneg %p58
        %p102 = pneg %p55
        %s103 = sand.u32 %s45, 1
        %s104 = scalar_lea.sflag [#allocation4], %s103
        %s105 = sand.u32 %s45, 1
        %s106 = smul.addr %s105, 8
        %s107 = scalar_lea.vmem [#allocation5], %s106
        %v108 = vld [vmem:[#allocation2] sm:$0xff]
        %109 = vst [vmem:[%s107] sm:$0xff] %v108
        %s110 = sand.u32 %s45, 1
        %s111 = scalar_lea.sflag [#allocation4], %s110
        %s112 = sand.u32 %s45, 1
        %s113 = smul.addr %s112, 8
        %s114 = scalar_lea.vmem [#allocation5], %s113
        // Predicated region
        $region29: #{tpu_custom_call.1} parent=23 // pred_check
          %p115 = pneg %p55
        $region30: #{tpu_custom_call.1} parent=23 // pred_check_branch
          %117 = sbr.rel (%p115) target = $region32
        $region31: #{tpu_custom_call.1} parent=23 // pred_region
          %s119 = ssub.s32 128, 128
          %120 = vsyncadd %s111, %s119
          %s121 = smul.addr %s16, 128
          %s122 = scalar_lea.hbm %s1, %s121
          %s124 = sshll.u32 %s114, 4
          %s125 = int_to_ptr.vmem [resolvable:$true] %s124
          %127 = dma.vmem_to_hbm [thread:$0]  %s125, 128, %s122, %s111
        $region32: #{tpu_custom_call.1} parent=23 // pred_fallthru
          _
      $region24: #{tpu_custom_call.1} parent=5 // pred_fallthru
        _
      %p128 = scmp.le.s32.totalorder 2, %s11
      // Predicated region
      $region33: #{tpu_custom_call.1} parent=5 // pred_check
        %p129 = pneg %p128
      $region34: #{tpu_custom_call.1} parent=5 // pred_check_branch
        %131 = sbr.rel (%p129) target = $region36
      $region35: #{tpu_custom_call.1} parent=5 // pred_region
        %s132 = ssub.s32 %s11, 2
        // Predicated region
        $region37: #{tpu_custom_call.1} parent=35 // pred_check
          %p133 = pneg %p61
        $region38: #{tpu_custom_call.1} parent=35 // pred_check_branch
          %135 = sbr.rel (%p133) target = $region40
        $region39: #{tpu_custom_call.1} parent=35 // pred_region
          %s136 = sand.u32 %s46, 1
          %s137 = scalar_lea.sflag [#allocation4], %s136
          %s138 = sand.u32 %s46, 1
          %s139 = smul.addr %s138, 8
          %s140 = scalar_lea.vmem [#allocation5], %s139
          %141 = dma.done %s137, 128
        $region40: #{tpu_custom_call.1} parent=35 // pred_fallthru
          _
      $region36: #{tpu_custom_call.1} parent=5 // pred_fallthru
        _
    $region6: #{tpu_custom_call.1} parent=1 // loop_footer
      %s15 = sadd.s32 1, %s11
    $region7: #{tpu_custom_call.1} parent=1 // loop_footer_branch
      %10 = sbr.rel target = $region3
    $region8: #{tpu_custom_call.1} parent=1 // loop_exit
      _
    %142 = vsyncpa [#allocation3], 1
    %s143 = scalar_lea.sflag [#allocation3], 1
    %144 = vsyncpa %s143, 1
    %145 = vsyncpa [#allocation4], 1
    %s146 = scalar_lea.sflag [#allocation4], 1
    %147 = vsyncpa %s146, 1

// kernel: tpu_custom_call.1
$region0: #{tpu_custom_call.1}
  #allocation0 [shape = 'u32[]', space=smem, size = 0x4, offset = 0x4, fixed_abs, tag = 'smem constant byte address 0x4 - core index']
  #allocation1 [shape = 'u32[144,128]{1,0:T(1,128)}', space=vmem, size = 0x12000, scoped, tag = 'internal scratch']
  %s0 = inlined_call_operand.hbm [shape: f32[16,256], index: 0, kind: input, shape index: {}]
  %s1 = inlined_call_operand.hbm [shape: bf16[256,128], index: 1, kind: input, shape index: {}]
  %s2 = inlined_call_operand.hbm [shape: bf16[256,128], index: 2, kind: input, shape index: {}]
  %s3 = inlined_call_operand.hbm [shape: f32[16,128], index: 3, kind: output, shape index: {0}]
  %s4 = inlined_call_operand.hbm [shape: f32[16,128], index: 4, kind: output, shape index: {1}]
  %5 = xla_tuple %s3, %s4
  %s6 = sld [smem:[#allocation0]]
  $region42: #{tpu_custom_call.1} parent=0
    _
  %s8 = ssub.s32 1, %s6
  %s9 = scalar_select 0, %s8, %s6
  $region1: #{tpu_custom_call.1} parent=0
    #allocation2 [shape = 'u8[16384]{0}', space=vmem, size = 0x4000, scoped, tag = 'input window, operand 0, single buffered']
    #allocation3 [shape = 's32[1]{0}', space=sflag, size = 0x4, scoped, tag = 'scoped memory for tpu_custom_call.1']
    #allocation4 [shape = 's32[1]{0}', space=sflag, size = 0x4, scoped, tag = 'scoped memory for tpu_custom_call.1']
    #allocation5 [shape = 'u8[65536]{0}', space=vmem, size = 0x10000, scoped, tag = 'input window, operand 1, single buffered']
    #allocation6 [shape = 's32[1]{0}', space=sflag, size = 0x4, scoped, tag = 'scoped memory for tpu_custom_call.1']
    #allocation7 [shape = 'u8[65536]{0}', space=vmem, size = 0x10000, scoped, tag = 'input window, operand 2, single buffered']
    #allocation8 [shape = 'u8[8192]{0}', space=vmem, size = 0x2000, scoped, tag = 'output window, operand 0, single buffered']
    #allocation9 [shape = 'u8[8192]{0}', space=vmem, size = 0x2000, scoped, tag = 'output window, operand 1, single buffered']
    #allocation10 [shape = 's32[1]{0}', space=sflag, size = 0x4, scoped, tag = 'scoped memory for tpu_custom_call.1']
    %10 = vsyncpa [#allocation3], 0
    %11 = vsyncpa [#allocation6], 0
    %12 = vsyncpa [#allocation4], 0
    %13 = vsyncpa [#allocation10], 0
    // Predicated region
    $region2: #{tpu_custom_call.1} parent=1 // pred_check
      _
    $region3: #{tpu_custom_call.1} parent=1 // pred_check_branch
      %15 = sbr.rel (0) target = $region5
    $region4: #{tpu_custom_call.1} parent=1 // pred_region
      %s17 = ssub.s32 512, 512
      %18 = vsyncadd [#allocation3], %s17
      %s19 = sshll.u32 [#allocation2], 4
      %s20 = int_to_ptr.vmem [resolvable:$true] %s19
      %25 = dma.hbm_to_vmem [thread:$0]  %s0, 512, %s20, [#allocation3], 256, 256, 16
    $region5: #{tpu_custom_call.1} parent=1 // pred_fallthru
      _
    // Predicated region
    $region6: #{tpu_custom_call.1} parent=1 // pred_check
      _
    $region7: #{tpu_custom_call.1} parent=1 // pred_check_branch
      %27 = sbr.rel (0) target = $region9
    $region8: #{tpu_custom_call.1} parent=1 // pred_region
      %s29 = ssub.s32 2048, 2048
      %30 = vsyncadd [#allocation6], %s29
      %s31 = sshll.u32 [#allocation5], 4
      %s32 = int_to_ptr.vmem [resolvable:$true] %s31
      %37 = dma.hbm_to_vmem [thread:$0]  %s1, 2048, %s32, [#allocation6], 64, 64, 4
    $region9: #{tpu_custom_call.1} parent=1 // pred_fallthru
      _
    // Predicated region
    $region10: #{tpu_custom_call.1} parent=1 // pred_check
      _
    $region11: #{tpu_custom_call.1} parent=1 // pred_check_branch
      %39 = sbr.rel (0) target = $region13
    $region12: #{tpu_custom_call.1} parent=1 // pred_region
      %s41 = ssub.s32 2048, 2048
      %42 = vsyncadd [#allocation6], %s41
      %s43 = sshll.u32 [#allocation7], 4
      %s44 = int_to_ptr.vmem [resolvable:$true] %s43
      %49 = dma.hbm_to_vmem [thread:$0]  %s2, 2048, %s44, [#allocation6], 64, 64, 4
    $region13: #{tpu_custom_call.1} parent=1 // pred_fallthru
      _
    // Predicated region
    $region14: #{tpu_custom_call.1} parent=1 // pred_check
      _
    $region15: #{tpu_custom_call.1} parent=1 // pred_check_branch
      %51 = sbr.rel (0) target = $region17
    $region16: #{tpu_custom_call.1} parent=1 // pred_region
      %52 = dma.done [#allocation3], 512
    $region17: #{tpu_custom_call.1} parent=1 // pred_fallthru
      _
    // Predicated region
    $region18: #{tpu_custom_call.1} parent=1 // pred_check
      _
    $region19: #{tpu_custom_call.1} parent=1 // pred_check_branch
      %54 = sbr.rel (0) target = $region21
    $region20: #{tpu_custom_call.1} parent=1 // pred_region
      %55 = dma.done [#allocation6], 2048
    $region21: #{tpu_custom_call.1} parent=1 // pred_fallthru
      _
    // Predicated region
    $region22: #{tpu_custom_call.1} parent=1 // pred_check
      _
    $region23: #{tpu_custom_call.1} parent=1 // pred_check_branch
      %57 = sbr.rel (0) target = $region25
    $region24: #{tpu_custom_call.1} parent=1 // pred_region
      %58 = dma.done [#allocation6], 2048
    $region25: #{tpu_custom_call.1} parent=1 // pred_fallthru
      _
    %v60 = vld [vmem:[#allocation2] sm:$0xff]
    %v61 = vld [vmem:[#allocation2 + $0x8] sm:$0xff]
    %v62 = vld [vmem:[#allocation2 + $0x10] sm:$0xff]
    %v63 = vld [vmem:[#allocation2 + $0x18] sm:$0xff]
    %v64 = vpack.c.bf16 %v62, %v60
    %v65 = vpack.c.bf16 %v63, %v61
    %v66 = vld [vmem:[#allocation5] sm:$0xf]
    %v67 = vld [vmem:[#allocation5 + $0x4] sm:$0xf]
    %v68 = vld [vmem:[#allocation5 + $0x8] sm:$0xf]
    %v69 = vld [vmem:[#allocation5 + $0xc] sm:$0xf]
    %v70 = vld [vmem:[#allocation5 + $0x10] sm:$0xf]
    %v71 = vld [vmem:[#allocation5 + $0x14] sm:$0xf]
    %v72 = vld [vmem:[#allocation5 + $0x18] sm:$0xf]
    %v73 = vld [vmem:[#allocation5 + $0x1c] sm:$0xf]
    %v74 = vld [vmem:[#allocation5 + $0x20] sm:$0xf]
    %v75 = vld [vmem:[#allocation5 + $0x24] sm:$0xf]
    %v76 = vld [vmem:[#allocation5 + $0x28] sm:$0xf]
    %v77 = vld [vmem:[#allocation5 + $0x2c] sm:$0xf]
    %v78 = vld [vmem:[#allocation5 + $0x30] sm:$0xf]
    %v79 = vld [vmem:[#allocation5 + $0x34] sm:$0xf]
    %v80 = vld [vmem:[#allocation5 + $0x38] sm:$0xf]
    %v81 = vld [vmem:[#allocation5 + $0x3c] sm:$0xf]
    %v82 = vld [vmem:[#allocation5 + $0x40] sm:$0xf]
    %v83 = vld [vmem:[#allocation5 + $0x44] sm:$0xf]
    %v84 = vld [vmem:[#allocation5 + $0x48] sm:$0xf]
    %v85 = vld [vmem:[#allocation5 + $0x4c] sm:$0xf]
    %v86 = vld [vmem:[#allocation5 + $0x50] sm:$0xf]
    %v87 = vld [vmem:[#allocation5 + $0x54] sm:$0xf]
    %v88 = vld [vmem:[#allocation5 + $0x58] sm:$0xf]
    %v89 = vld [vmem:[#allocation5 + $0x5c] sm:$0xf]
    %v90 = vld [vmem:[#allocation5 + $0x60] sm:$0xf]
    %v91 = vld [vmem:[#allocation5 + $0x64] sm:$0xf]
    %v92 = vld [vmem:[#allocation5 + $0x68] sm:$0xf]
    %v93 = vld [vmem:[#allocation5 + $0x6c] sm:$0xf]
    %v94 = vld [vmem:[#allocation5 + $0x70] sm:$0xf]
    %v95 = vld [vmem:[#allocation5 + $0x74] sm:$0xf]
    %v96 = vld [vmem:[#allocation5 + $0x78] sm:$0xf]
    %v97 = vld [vmem:[#allocation5 + $0x7c] sm:$0xf]
    %v130 = vunpack.c.l.b16 %v66
    %v131 = vunpack.c.l.b16 %v67
    %v132 = vunpack.c.l.b16 %v68
    %v133 = vunpack.c.l.b16 %v69
    %v134 = vunpack.c.l.b16 %v70
    %v135 = vunpack.c.l.b16 %v71
    %v136 = vunpack.c.l.b16 %v72
    %v137 = vunpack.c.l.b16 %v73
    %v138 = vunpack.c.l.b16 %v74
    %v139 = vunpack.c.l.b16 %v75
    %v140 = vunpack.c.l.b16 %v76
    %v141 = vunpack.c.l.b16 %v77
    %v142 = vunpack.c.l.b16 %v78
    %v143 = vunpack.c.l.b16 %v79
    %v144 = vunpack.c.l.b16 %v80
    %v145 = vunpack.c.l.b16 %v81
    %v146 = vunpack.c.l.b16 %v82
    %v147 = vunpack.c.l.b16 %v83
    %v148 = vunpack.c.l.b16 %v84
    %v149 = vunpack.c.l.b16 %v85
    %v150 = vunpack.c.l.b16 %v86
    %v151 = vunpack.c.l.b16 %v87
    %v152 = vunpack.c.l.b16 %v88
    %v153 = vunpack.c.l.b16 %v89
    %v154 = vunpack.c.l.b16 %v90
    %v155 = vunpack.c.l.b16 %v91
    %v156 = vunpack.c.l.b16 %v92
    %v157 = vunpack.c.l.b16 %v93
    %v158 = vunpack.c.l.b16 %v94
    %v159 = vunpack.c.l.b16 %v95
    %v160 = vunpack.c.l.b16 %v96
    %v161 = vunpack.c.l.b16 %v97
    %v162 = vpack.c.b16 %v131, %v130
    %v163 = vpack.c.b16 %v133, %v132
    %v164 = vpack.c.b16 %v135, %v134
    %v165 = vpack.c.b16 %v137, %v136
    %v166 = vpack.c.b16 %v139, %v138
    %v167 = vpack.c.b16 %v141, %v140
    %v168 = vpack.c.b16 %v143, %v142
    %v169 = vpack.c.b16 %v145, %v144
    %v170 = vpack.c.b16 %v147, %v146
    %v171 = vpack.c.b16 %v149, %v148
    %v172 = vpack.c.b16 %v151, %v150
    %v173 = vpack.c.b16 %v153, %v152
    %v174 = vpack.c.b16 %v155, %v154
    %v175 = vpack.c.b16 %v157, %v156
    %v176 = vpack.c.b16 %v159, %v158
    %v177 = vpack.c.b16 %v161, %v160
    %194 = vmatprep.subr.bf16.mxu0 0
    %195 = vmatpush1.bf16.msra.mxu0 %v162
    %196 = vmatprep.subr.bf16.mxu0 0
    %197 = vmatpush1.bf16.msra.mxu0 %v163
    %198 = vmatprep.subr.bf16.mxu0 0
    %199 = vmatpush1.bf16.msra.mxu0 %v164
    %200 = vmatprep.subr.bf16.mxu0 0
    %201 = vmatpush1.bf16.msra.mxu0 %v165
    %202 = vmatprep.subr.bf16.mxu0 0
    %203 = vmatpush1.bf16.msra.mxu0 %v166
    %204 = vmatprep.subr.bf16.mxu0 0
    %205 = vmatpush1.bf16.msra.mxu0 %v167
    %206 = vmatprep.subr.bf16.mxu0 0
    %207 = vmatpush1.bf16.msra.mxu0 %v168
    %208 = vmatprep.subr.bf16.mxu0 0
    %209 = vmatpush1.bf16.msra.mxu0 %v169
    %210 = vmatprep.subr.bf16.mxu0 0
    %211 = vmatpush1.bf16.msra.mxu0 %v170
    %212 = vmatprep.subr.bf16.mxu0 0
    %213 = vmatpush1.bf16.msra.mxu0 %v171
    %214 = vmatprep.subr.bf16.mxu0 0
    %215 = vmatpush1.bf16.msra.mxu0 %v172
    %216 = vmatprep.subr.bf16.mxu0 0
    %217 = vmatpush1.bf16.msra.mxu0 %v173
    %218 = vmatprep.subr.bf16.mxu0 0
    %219 = vmatpush1.bf16.msra.mxu0 %v174
    %220 = vmatprep.subr.bf16.mxu0 0
    %221 = vmatpush1.bf16.msra.mxu0 %v175
    %222 = vmatprep.subr.bf16.mxu0 0
    %223 = vmatpush1.bf16.msra.mxu0 %v176
    %224 = vmatprep.subr.bf16.mxu0 0
    %225 = vmatpush1.bf16.msra.mxu0 %v177
    %226 = vmatprep.mubr.bf16.mxu0 %v65
    %227 = vmatmul.mubr.bf16.gmra.mrb[0].mxu0 %v64
    %v228 = vpop.f32.mrb[0].mxu0
    %v229 = vadd.f32 0.0, %v228
    %v230 = vpop.f32.mrb[0].mxu0
    %v231 = vpop.f32.mrb[0].mxu0
    %v232 = vadd.f32 0.0, %v231
    %v233 = vpop.f32.mrb[0].mxu0
    %234 = vdwg.mxu0
    %235 = vst [vmem:[#allocation8] sm:$0xff] %v229
    %236 = vst [vmem:[#allocation8 + $0x8] sm:$0xff] %v232
    %v237 = vld [vmem:[#allocation7] sm:$0xf]
    %v238 = vld [vmem:[#allocation7 + $0x4] sm:$0xf]
    %v239 = vld [vmem:[#allocation7 + $0x8] sm:$0xf]
    %v240 = vld [vmem:[#allocation7 + $0xc] sm:$0xf]
    %v241 = vld [vmem:[#allocation7 + $0x10] sm:$0xf]
    %v242 = vld [vmem:[#allocation7 + $0x14] sm:$0xf]
    %v243 = vld [vmem:[#allocation7 + $0x18] sm:$0xf]
    %v244 = vld [vmem:[#allocation7 + $0x1c] sm:$0xf]
    %v245 = vld [vmem:[#allocation7 + $0x20] sm:$0xf]
    %v246 = vld [vmem:[#allocation7 + $0x24] sm:$0xf]
    %v247 = vld [vmem:[#allocation7 + $0x28] sm:$0xf]
    %v248 = vld [vmem:[#allocation7 + $0x2c] sm:$0xf]
    %v249 = vld [vmem:[#allocation7 + $0x30] sm:$0xf]
    %v250 = vld [vmem:[#allocation7 + $0x34] sm:$0xf]
    %v251 = vld [vmem:[#allocation7 + $0x38] sm:$0xf]
    %v252 = vld [vmem:[#allocation7 + $0x3c] sm:$0xf]
    %v253 = vld [vmem:[#allocation7 + $0x40] sm:$0xf]
    %v254 = vld [vmem:[#allocation7 + $0x44] sm:$0xf]
    %v255 = vld [vmem:[#allocation7 + $0x48] sm:$0xf]
    %v256 = vld [vmem:[#allocation7 + $0x4c] sm:$0xf]
    %v257 = vld [vmem:[#allocation7 + $0x50] sm:$0xf]
    %v258 = vld [vmem:[#allocation7 + $0x54] sm:$0xf]
    %v259 = vld [vmem:[#allocation7 + $0x58] sm:$0xf]
    %v260 = vld [vmem:[#allocation7 + $0x5c] sm:$0xf]
    %v261 = vld [vmem:[#allocation7 + $0x60] sm:$0xf]
    %v262 = vld [vmem:[#allocation7 + $0x64] sm:$0xf]
    %v263 = vld [vmem:[#allocation7 + $0x68] sm:$0xf]
    %v264 = vld [vmem:[#allocation7 + $0x6c] sm:$0xf]
    %v265 = vld [vmem:[#allocation7 + $0x70] sm:$0xf]
    %v266 = vld [vmem:[#allocation7 + $0x74] sm:$0xf]
    %v267 = vld [vmem:[#allocation7 + $0x78] sm:$0xf]
    %v268 = vld [vmem:[#allocation7 + $0x7c] sm:$0xf]
    %v301 = vunpack.c.l.b16 %v237
    %v302 = vunpack.c.l.b16 %v238
    %v303 = vunpack.c.l.b16 %v239
    %v304 = vunpack.c.l.b16 %v240
    %v305 = vunpack.c.l.b16 %v241
    %v306 = vunpack.c.l.b16 %v242
    %v307 = vunpack.c.l.b16 %v243
    %v308 = vunpack.c.l.b16 %v244
    %v309 = vunpack.c.l.b16 %v245
    %v310 = vunpack.c.l.b16 %v246
    %v311 = vunpack.c.l.b16 %v247
    %v312 = vunpack.c.l.b16 %v248
    %v313 = vunpack.c.l.b16 %v249
    %v314 = vunpack.c.l.b16 %v250
    %v315 = vunpack.c.l.b16 %v251
    %v316 = vunpack.c.l.b16 %v252
    %v317 = vunpack.c.l.b16 %v253
    %v318 = vunpack.c.l.b16 %v254
    %v319 = vunpack.c.l.b16 %v255
    %v320 = vunpack.c.l.b16 %v256
    %v321 = vunpack.c.l.b16 %v257
    %v322 = vunpack.c.l.b16 %v258
    %v323 = vunpack.c.l.b16 %v259
    %v324 = vunpack.c.l.b16 %v260
    %v325 = vunpack.c.l.b16 %v261
    %v326 = vunpack.c.l.b16 %v262
    %v327 = vunpack.c.l.b16 %v263
    %v328 = vunpack.c.l.b16 %v264
    %v329 = vunpack.c.l.b16 %v265
    %v330 = vunpack.c.l.b16 %v266
    %v331 = vunpack.c.l.b16 %v267
    %v332 = vunpack.c.l.b16 %v268
    %v333 = vpack.c.b16 %v302, %v301
    %v334 = vpack.c.b16 %v304, %v303
    %v335 = vpack.c.b16 %v306, %v305
    %v336 = vpack.c.b16 %v308, %v307
    %v337 = vpack.c.b16 %v310, %v309
    %v338 = vpack.c.b16 %v312, %v311
    %v339 = vpack.c.b16 %v314, %v313
    %v340 = vpack.c.b16 %v316, %v315
    %v341 = vpack.c.b16 %v318, %v317
    %v342 = vpack.c.b16 %v320, %v319
    %v343 = vpack.c.b16 %v322, %v321
    %v344 = vpack.c.b16 %v324, %v323
    %v345 = vpack.c.b16 %v326, %v325
    %v346 = vpack.c.b16 %v328, %v327
    %v347 = vpack.c.b16 %v330, %v329
    %v348 = vpack.c.b16 %v332, %v331
    %365 = vmatprep.subr.bf16.mxu0 0
    %366 = vmatpush1.bf16.msra.mxu0 %v333
    %367 = vmatprep.subr.bf16.mxu0 0
    %368 = vmatpush1.bf16.msra.mxu0 %v334
    %369 = vmatprep.subr.bf16.mxu0 0
    %370 = vmatpush1.bf16.msra.mxu0 %v335
    %371 = vmatprep.subr.bf16.mxu0 0
    %372 = vmatpush1.bf16.msra.mxu0 %v336
    %373 = vmatprep.subr.bf16.mxu0 0
    %374 = vmatpush1.bf16.msra.mxu0 %v337
    %375 = vmatprep.subr.bf16.mxu0 0
    %376 = vmatpush1.bf16.msra.mxu0 %v338
    %377 = vmatprep.subr.bf16.mxu0 0
    %378 = vmatpush1.bf16.msra.mxu0 %v339
    %379 = vmatprep.subr.bf16.mxu0 0
    %380 = vmatpush1.bf16.msra.mxu0 %v340
    %381 = vmatprep.subr.bf16.mxu0 0
    %382 = vmatpush1.bf16.msra.mxu0 %v341
    %383 = vmatprep.subr.bf16.mxu0 0
    %384 = vmatpush1.bf16.msra.mxu0 %v342
    %385 = vmatprep.subr.bf16.mxu0 0
    %386 = vmatpush1.bf16.msra.mxu0 %v343
    %387 = vmatprep.subr.bf16.mxu0 0
    %388 = vmatpush1.bf16.msra.mxu0 %v344
    %389 = vmatprep.subr.bf16.mxu0 0
    %390 = vmatpush1.bf16.msra.mxu0 %v345
    %391 = vmatprep.subr.bf16.mxu0 0
    %392 = vmatpush1.bf16.msra.mxu0 %v346
    %393 = vmatprep.subr.bf16.mxu0 0
    %394 = vmatpush1.bf16.msra.mxu0 %v347
    %395 = vmatprep.subr.bf16.mxu0 0
    %396 = vmatpush1.bf16.msra.mxu0 %v348
    %397 = vmatprep.mubr.bf16.mxu0 %v65
    %398 = vmatmul.mubr.bf16.gmra.mrb[0].mxu0 %v64
    %v399 = vpop.f32.mrb[0].mxu0
    %v400 = vadd.f32 0.0, %v399
    %v401 = vpop.f32.mrb[0].mxu0
    %v402 = vpop.f32.mrb[0].mxu0
    %v403 = vadd.f32 0.0, %v402
    %v404 = vpop.f32.mrb[0].mxu0
    %405 = vdwg.mxu0
    %406 = vst [vmem:[#allocation9] sm:$0xff] %v400
    %407 = vst [vmem:[#allocation9 + $0x8] sm:$0xff] %v403
    // Predicated region
    $region26: #{tpu_custom_call.1} parent=1 // pred_check
      _
    $region27: #{tpu_custom_call.1} parent=1 // pred_check_branch
      %409 = sbr.rel (0) target = $region29
    $region28: #{tpu_custom_call.1} parent=1 // pred_region
      %s411 = ssub.s32 256, 256
      %412 = vsyncadd [#allocation4], %s411
      %s413 = sshll.u32 [#allocation8], 4
      %s414 = int_to_ptr.vmem [resolvable:$true] %s413
      %419 = dma.vmem_to_hbm [thread:$0]  %s414, 256, %s3, [#allocation4], 128, 128, 8
    $region29: #{tpu_custom_call.1} parent=1 // pred_fallthru
      _
    // Predicated region
    $region30: #{tpu_custom_call.1} parent=1 // pred_check
      _
    $region31: #{tpu_custom_call.1} parent=1 // pred_check_branch
      %421 = sbr.rel (0) target = $region33
    $region32: #{tpu_custom_call.1} parent=1 // pred_region
      %s423 = ssub.s32 256, 256
      %424 = vsyncadd [#allocation10], %s423
      %s425 = sshll.u32 [#allocation9], 4
      %s426 = int_to_ptr.vmem [resolvable:$true] %s425
      %431 = dma.vmem_to_hbm [thread:$0]  %s426, 256, %s4, [#allocation10], 128, 128, 8
    $region33: #{tpu_custom_call.1} parent=1 // pred_fallthru
      _
    // Predicated region
    $region34: #{tpu_custom_call.1} parent=1 // pred_check
      _
    $region35: #{tpu_custom_call.1} parent=1 // pred_check_branch
      %433 = sbr.rel (0) target = $region37
    $region36: #{tpu_custom_call.1} parent=1 // pred_region
      %434 = dma.done [#allocation4], 256
    $region37: #{tpu_custom_call.1} parent=1 // pred_fallthru
      _
    // Predicated region
    $region38: #{tpu_custom_call.1} parent=1 // pred_check
      _
    $region39: #{tpu_custom_call.1} parent=1 // pred_check_branch
      %436 = sbr.rel (0) target = $region41
    $region40: #{tpu_custom_call.1} parent=1 // pred_region
      %437 = dma.done [#allocation10], 256
    $region41: #{tpu_custom_call.1} parent=1 // pred_fallthru
      _
    %438 = vsyncpa [#allocation3], 1
    %439 = vsyncpa [#allocation6], 1
    %440 = vsyncpa [#allocation4], 1
    %441 = vsyncpa [#allocation10], 1

</llo_original>
